<compile_context>
chip_gen: v7x
topology: tpu7x:2x2x1
jax: 0.10.0
libtpu: 0.0.40
codegen_flags: <defaults>
</compile_context>

<pallas_src>
import jax
import jax.numpy as jnp
from jax.experimental import pallas as pl
from jax.experimental.pallas import tpu as pltpu

SUBLANE_BF16 = 16  # bf16 packs 2 rows per 32-bit sublane -> tile batch in multiples of 16


def _round_up(x, m):
    return (x + m - 1) // m * m


# ----------------------------------------------------------------------------
# Kernel
# ----------------------------------------------------------------------------
def vae_kernel(x_ref, eps_ref,
               w1_ref, b1_ref,          # encoder hidden      [x_size, h_dim]
               wh_ref, bh_ref,          # fused mean|var head [h_dim, 2*latent]
               wd1_ref, bd1_ref,        # decoder hidden      [latent, h_dim]
               wd2_ref, bd2_ref,        # decoder output      [h_dim, x_size]
               img_ref, mv_ref):
    x = x_ref[...]                                                   # bf16 [tb, x_size]

    # ----- Encoder ----- (bf16 MXU inputs, f32 accumulation, f32 bias/ReLU)
    h = jnp.dot(x, w1_ref[...], preferred_element_type=jnp.float32) + b1_ref[...]
    h = jnp.maximum(h, 0.0)

    # Fused mean|var head: one MXU push, packed [tb, 2*latent] output.
    mv = jnp.dot(h.astype(jnp.bfloat16), wh_ref[...],
                 preferred_element_type=jnp.float32) + bh_ref[...]
    ld = mv.shape[-1] // 2
    mean = mv[:, :ld]
    var = mv[:, ld:]

    # ----- Reparameterization: z = mean + exp(var/2) * eps  (f32, EUP exp) -----
    z = mean + jnp.exp(var * 0.5) * eps_ref[...].astype(jnp.float32)

    # ----- Decoder -----
    hd = jnp.dot(z.astype(jnp.bfloat16), wd1_ref[...],
                 preferred_element_type=jnp.float32) + bd1_ref[...]
    hd = jnp.maximum(hd, 0.0)
    logits = jnp.dot(hd.astype(jnp.bfloat16), wd2_ref[...],
                     preferred_element_type=jnp.float32) + bd2_ref[...]

    # Sigmoid via EUP exp + approx reciprocal (keeps the divide off the VALU slot).
    img = pl.reciprocal(1.0 + jnp.exp(-logits), approx=True)

    img_ref[...] = img.astype(img_ref.dtype)                         # bf16 store
    mv_ref[...] = mv.astype(mv_ref.dtype)                            # bf16 packed mean|var


# ----------------------------------------------------------------------------
# Wrapper
# ----------------------------------------------------------------------------
def _vmem_limit_bytes(tb, x_size, h_dim, latent_dim):
    """Resident weights (double-buffered by default) + 2x batch tiles + headroom."""
    wbytes = 2 * (x_size * h_dim + h_dim * 2 * latent_dim
                  + latent_dim * h_dim + h_dim * x_size)              # bf16 weights
    bbytes = 4 * (2 * h_dim + 2 * latent_dim + x_size)                # f32 biases
    tiles = 2 * tb * (x_size + latent_dim + x_size + 2 * latent_dim)  # bf16 in+out tiles
    need = 2 * (wbytes + bbytes) + 2 * tiles + (16 << 20)             # + f32 intermediates/scratch
    return int(min(need, 100 << 20))


def prepare_params(p):
    """One-time layout prep (outside the hot path): bf16 [in,out] weights, fused mean|var
    head, f32 biases shaped [1, out]."""
    return dict(
        w1=p["w1"].astype(jnp.bfloat16),
        b1=p["b1"].astype(jnp.float32),
        wh=jnp.concatenate([p["wm"], p["wv"]], axis=1).astype(jnp.bfloat16),
        bh=jnp.concatenate([p["bm"], p["bv"]], axis=1).astype(jnp.float32),
        wd1=p["wd1"].astype(jnp.bfloat16),
        bd1=p["bd1"].astype(jnp.float32),
        wd2=p["wd2"].astype(jnp.bfloat16),
        bd2=p["bd2"].astype(jnp.float32),
    )


def vae_forward(x, eps, kp, *, batch_tile=512):
    """x: [B, x_size], eps: [B, latent_dim] (bf16 preferred) -> (img, mean, var) in bf16."""
    B, x_size = x.shape
    latent_dim = eps.shape[1]
    h_dim = kp["w1"].shape[1]
    assert kp["wh"].shape == (h_dim, 2 * latent_dim)

    # Batch tiling: tile is a multiple of 16 (bf16 sublane pack); pad batch to a tile multiple.
    # On v7x prefer batch_tile such that (Bp // tb) is a multiple of 2 (TensorCores).
    tb = _round_up(min(batch_tile, B), SUBLANE_BF16)
    Bp = _round_up(B, tb)
    grid = (Bp // tb,)

    xp = x.astype(jnp.bfloat16)        # no-op if caller already provides bf16
    epsp = eps.astype(jnp.bfloat16)
    if Bp != B:
        xp = jnp.pad(xp, ((0, Bp - B), (0, 0)))
        epsp = jnp.pad(epsp, ((0, Bp - B), (0, 0)))

    batch_map = lambda i: (i, 0)       # batch-tiled arrays
    resident = lambda i: (0, 0)        # weights/biases resident in VMEM

    img, mv = pl.pallas_call(
        vae_kernel,
        out_shape=(
            jax.ShapeDtypeStruct((Bp, x_size), jnp.bfloat16),
            jax.ShapeDtypeStruct((Bp, 2 * latent_dim), jnp.bfloat16),
        ),
        grid=grid,
        in_specs=[
            pl.BlockSpec((tb, x_size), batch_map),             # x (no lane pad)
            pl.BlockSpec((tb, latent_dim), batch_map),         # eps (no lane pad)
            pl.BlockSpec((x_size, h_dim), resident),           # w1
            pl.BlockSpec((1, h_dim), resident),                # b1
            pl.BlockSpec((h_dim, 2 * latent_dim), resident),   # wh (mean|var fused)
            pl.BlockSpec((1, 2 * latent_dim), resident),       # bh
            pl.BlockSpec((latent_dim, h_dim), resident),       # wd1
            pl.BlockSpec((1, h_dim), resident),                # bd1
            pl.BlockSpec((h_dim, x_size), resident),           # wd2
            pl.BlockSpec((1, x_size), resident),               # bd2
        ],
        out_specs=(
            pl.BlockSpec((tb, x_size), batch_map),             # img (bf16)
            pl.BlockSpec((tb, 2 * latent_dim), batch_map),     # packed mean|var (bf16)
        ),
        compiler_params=pltpu.CompilerParams(
            dimension_semantics=("parallel",),                 # shard batch across TCs on v7x
            vmem_limit_bytes=_vmem_limit_bytes(tb, x_size, h_dim, latent_dim),
        ),
    )(xp, epsp, kp["w1"], kp["b1"], kp["wh"], kp["bh"],
      kp["wd1"], kp["bd1"], kp["wd2"], kp["bd2"])

    img = img[:B]
    mean = mv[:B, :latent_dim]
    var = mv[:B, latent_dim:]
    return img, mean, var


# ----------------------------------------------------------------------------
# Reference + test harness
# ----------------------------------------------------------------------------
def init_params(key, x_size, h_dim, latent_dim):
    """Deterministic synthetic parameters (PyTorch nn.Linear init). Weights stored [in, out]."""
    ks = jax.random.split(key, 10)

    def lin(kw, kb, fan_in, fan_out):
        bound = 1.0 / jnp.sqrt(fan_in)
        w = jax.random.uniform(kw, (fan_in, fan_out), jnp.float32, -bound, bound)
        b = jax.random.uniform(kb, (1, fan_out), jnp.float32, -bound, bound)
        return w, b

    w1,  b1  = lin(ks[0], ks[1], x_size, h_dim)
    wm,  bm  = lin(ks[2], ks[3], h_dim, latent_dim)
    wv,  bv  = lin(ks[4], ks[5], h_dim, latent_dim)
    wd1, bd1 = lin(ks[6], ks[7], latent_dim, h_dim)
    wd2, bd2 = lin(ks[8], ks[9], h_dim, x_size)
    return dict(w1=w1, b1=b1, wm=wm, bm=bm, wv=wv, bv=bv,
                wd1=wd1, bd1=bd1, wd2=wd2, bd2=bd2)


def _ref_forward(x, eps, p, cast):
    """Pure-JAX reference; `cast` controls input precision per matmul (f32 accumulation)."""
    def dot(a, w):
        return jnp.dot(cast(a), cast(w), preferred_element_type=jnp.float32)
    h = jnp.maximum(dot(x, p["w1"]) + p["b1"], 0.0)
    mean = dot(h, p["wm"]) + p["bm"]
    var = dot(h, p["wv"]) + p["bv"]
    z = mean + jnp.exp(var * 0.5) * eps
    hd = jnp.maximum(dot(z, p["wd1"]) + p["bd1"], 0.0)
    img = jax.nn.sigmoid(dot(hd, p["wd2"]) + p["bd2"])
    return img, mean, var


if __name__ == "__main__":
    B, x_size, h_dim, latent_dim = 64, 64, 32, 16

    key = jax.random.PRNGKey(0)
    k_param, k_x, k_eps = jax.random.split(key, 3)

    params = init_params(k_param, x_size, h_dim, latent_dim)
    kparams = prepare_params(params)                       # one-time weight prep

    # Inputs produced directly in bf16 -> no wrapper cast/pad pass over the hot inputs.
    x = jax.random.normal(k_x, (B, x_size), jnp.bfloat16)
    eps = jax.random.normal(k_eps, (B, latent_dim), jnp.bfloat16)

    # batch_tile=32 -> 2 grid steps at B=64 (even step count: both v7x TensorCores stay busy).
    img, mean, var = vae_forward(x, eps, kparams, batch_tile=32)
    jax.block_until_ready((img, mean, var))

    assert img.shape == (B, x_size)
    assert mean.shape == (B, latent_dim) and var.shape == (B, latent_dim)
    assert img.dtype == jnp.bfloat16 and mean.dtype == jnp.bfloat16

    xf = x.astype(jnp.float32)
    ef = eps.astype(jnp.float32)

    # Reference 1: same bf16-input / f32-accumulation math -> error ~ bf16 output rounding.
    img_b, mean_b, var_b = _ref_forward(xf, ef, params, lambda a: a.astype(jnp.bfloat16))
    assert jnp.allclose(img.astype(jnp.float32), img_b, atol=2e-2)
    assert jnp.allclose(mean.astype(jnp.float32), mean_b, atol=2e-2)
    assert jnp.allclose(var.astype(jnp.float32), var_b, atol=2e-2)

    # Reference 2: full f32 spec math -> loose tolerance (bf16 MXU inputs + bf16 outputs).
    img_f, mean_f, var_f = _ref_forward(xf, ef, params, lambda a: a)
    assert jnp.allclose(img.astype(jnp.float32), img_f, atol=8e-2)
    assert jnp.allclose(mean.astype(jnp.float32), mean_f, atol=8e-2)
    assert jnp.allclose(var.astype(jnp.float32), var_f, atol=8e-2)

    print("KERNEL_OK")
</pallas_src>

<mosaic_0001>
module attributes {stable_mosaic.version = 11 : i64} {
  func.func @vae_kernel(%arg0: i32, %arg1: memref<32x64xbf16, #tpu.memory_space<vmem>>, %arg2: memref<32x16xbf16, #tpu.memory_space<vmem>>, %arg3: memref<64x32xbf16, #tpu.memory_space<vmem>>, %arg4: memref<1x32xf32, #tpu.memory_space<vmem>>, %arg5: memref<32x32xbf16, #tpu.memory_space<vmem>>, %arg6: memref<1x32xf32, #tpu.memory_space<vmem>>, %arg7: memref<16x32xbf16, #tpu.memory_space<vmem>>, %arg8: memref<1x32xf32, #tpu.memory_space<vmem>>, %arg9: memref<32x64xbf16, #tpu.memory_space<vmem>>, %arg10: memref<1x64xf32, #tpu.memory_space<vmem>>, %arg11: memref<32x64xbf16, #tpu.memory_space<vmem>>, %arg12: memref<32x32xbf16, #tpu.memory_space<vmem>>) attributes {dimension_semantics = [#tpu.dimension_semantics<parallel>], iteration_bounds = array<i64: 2>, scalar_prefetch = 0 : i64, scratch_operands = 0 : i64, tpu.core_type = #tpu.core_type<tc>, window_params = [{transform_indices = @transform_0, window_bounds = array<i64: 32, 64>}, {transform_indices = @transform_1, window_bounds = array<i64: 32, 16>}, {pipeline_mode = #tpu.pipeline_mode<synchronous>, transform_indices = @transform_2, window_bounds = array<i64: 64, 32>}, {pipeline_mode = #tpu.pipeline_mode<synchronous>, transform_indices = @transform_3, window_bounds = array<i64: 1, 32>}, {pipeline_mode = #tpu.pipeline_mode<synchronous>, transform_indices = @transform_4, window_bounds = array<i64: 32, 32>}, {pipeline_mode = #tpu.pipeline_mode<synchronous>, transform_indices = @transform_5, window_bounds = array<i64: 1, 32>}, {pipeline_mode = #tpu.pipeline_mode<synchronous>, transform_indices = @transform_6, window_bounds = array<i64: 16, 32>}, {pipeline_mode = #tpu.pipeline_mode<synchronous>, transform_indices = @transform_7, window_bounds = array<i64: 1, 32>}, {pipeline_mode = #tpu.pipeline_mode<synchronous>, transform_indices = @transform_8, window_bounds = array<i64: 32, 64>}, {pipeline_mode = #tpu.pipeline_mode<synchronous>, transform_indices = @transform_9, window_bounds = array<i64: 1, 64>}, {transform_indices = @transform_10, window_bounds = array<i64: 32, 64>}, {transform_indices = @transform_11, window_bounds = array<i64: 32, 32>}]} {
    %c0 = arith.constant 0 : index
    %c0_0 = arith.constant 0 : index
    %0 = vector.load %arg1[%c0, %c0_0] : memref<32x64xbf16, #tpu.memory_space<vmem>>, vector<32x64xbf16>
    %c0_1 = arith.constant 0 : index
    %c0_2 = arith.constant 0 : index
    %1 = vector.load %arg3[%c0_1, %c0_2] : memref<64x32xbf16, #tpu.memory_space<vmem>>, vector<64x32xbf16>
    %cst = arith.constant dense<0.000000e+00> : vector<32x32xf32>
    %2 = tpu.matmul %0, %1, %cst {dimension_numbers = #tpu.dot_dimension_numbers<[1], [0], [0], [1], [0, 0, 1, 1], [], []>} : vector<32x64xbf16>, vector<64x32xbf16>, vector<32x32xf32> -> vector<32x32xf32>
    %c0_3 = arith.constant 0 : index
    %c0_4 = arith.constant 0 : index
    %3 = vector.load %arg4[%c0_3, %c0_4] : memref<1x32xf32, #tpu.memory_space<vmem>>, vector<1x32xf32>
    %4 = vector.broadcast %3 : vector<1x32xf32> to vector<32x32xf32>
    %5 = arith.addf %2, %4 : vector<32x32xf32>
    %cst_5 = arith.constant 0.000000e+00 : f32
    %6 = vector.broadcast %cst_5 : f32 to vector<32x32xf32>
    %7 = arith.maximumf %5, %6 : vector<32x32xf32>
    %8 = arith.truncf %7 : vector<32x32xf32> to vector<32x32xbf16>
    %c0_6 = arith.constant 0 : index
    %c0_7 = arith.constant 0 : index
    %9 = vector.load %arg5[%c0_6, %c0_7] : memref<32x32xbf16, #tpu.memory_space<vmem>>, vector<32x32xbf16>
    %cst_8 = arith.constant dense<0.000000e+00> : vector<32x32xf32>
    %10 = tpu.matmul %8, %9, %cst_8 {dimension_numbers = #tpu.dot_dimension_numbers<[1], [0], [0], [1], [0, 0, 1, 1], [], []>} : vector<32x32xbf16>, vector<32x32xbf16>, vector<32x32xf32> -> vector<32x32xf32>
    %c0_9 = arith.constant 0 : index
    %c0_10 = arith.constant 0 : index
    %11 = vector.load %arg6[%c0_9, %c0_10] : memref<1x32xf32, #tpu.memory_space<vmem>>, vector<1x32xf32>
    %12 = vector.broadcast %11 : vector<1x32xf32> to vector<32x32xf32>
    %13 = arith.addf %10, %12 : vector<32x32xf32>
    %14 = vector.extract_strided_slice %13 {offsets = [0, 0], sizes = [32, 16], strides = [1, 1]} : vector<32x32xf32> to vector<32x16xf32>
    %15 = vector.extract_strided_slice %13 {offsets = [0, 16], sizes = [32, 16], strides = [1, 1]} : vector<32x32xf32> to vector<32x16xf32>
    %cst_11 = arith.constant 5.000000e-01 : f32
    %16 = vector.broadcast %cst_11 : f32 to vector<32x16xf32>
    %17 = arith.mulf %15, %16 : vector<32x16xf32>
    %18 = math.exp %17 : vector<32x16xf32>
    %c0_12 = arith.constant 0 : index
    %c0_13 = arith.constant 0 : index
    %19 = vector.load %arg2[%c0_12, %c0_13] : memref<32x16xbf16, #tpu.memory_space<vmem>>, vector<32x16xbf16>
    %20 = arith.extf %19 : vector<32x16xbf16> to vector<32x16xf32>
    %21 = arith.mulf %18, %20 : vector<32x16xf32>
    %22 = arith.addf %14, %21 : vector<32x16xf32>
    %23 = arith.truncf %22 : vector<32x16xf32> to vector<32x16xbf16>
    %c0_14 = arith.constant 0 : index
    %c0_15 = arith.constant 0 : index
    %24 = vector.load %arg7[%c0_14, %c0_15] : memref<16x32xbf16, #tpu.memory_space<vmem>>, vector<16x32xbf16>
    %cst_16 = arith.constant dense<0.000000e+00> : vector<32x32xf32>
    %25 = tpu.matmul %23, %24, %cst_16 {dimension_numbers = #tpu.dot_dimension_numbers<[1], [0], [0], [1], [0, 0, 1, 1], [], []>} : vector<32x16xbf16>, vector<16x32xbf16>, vector<32x32xf32> -> vector<32x32xf32>
    %c0_17 = arith.constant 0 : index
    %c0_18 = arith.constant 0 : index
    %26 = vector.load %arg8[%c0_17, %c0_18] : memref<1x32xf32, #tpu.memory_space<vmem>>, vector<1x32xf32>
    %27 = vector.broadcast %26 : vector<1x32xf32> to vector<32x32xf32>
    %28 = arith.addf %25, %27 : vector<32x32xf32>
    %cst_19 = arith.constant 0.000000e+00 : f32
    %29 = vector.broadcast %cst_19 : f32 to vector<32x32xf32>
    %30 = arith.maximumf %28, %29 : vector<32x32xf32>
    %31 = arith.truncf %30 : vector<32x32xf32> to vector<32x32xbf16>
    %c0_20 = arith.constant 0 : index
    %c0_21 = arith.constant 0 : index
    %32 = vector.load %arg9[%c0_20, %c0_21] : memref<32x64xbf16, #tpu.memory_space<vmem>>, vector<32x64xbf16>
    %cst_22 = arith.constant dense<0.000000e+00> : vector<32x64xf32>
    %33 = tpu.matmul %31, %32, %cst_22 {dimension_numbers = #tpu.dot_dimension_numbers<[1], [0], [0], [1], [0, 0, 1, 1], [], []>} : vector<32x32xbf16>, vector<32x64xbf16>, vector<32x64xf32> -> vector<32x64xf32>
    %c0_23 = arith.constant 0 : index
    %c0_24 = arith.constant 0 : index
    %34 = vector.load %arg10[%c0_23, %c0_24] : memref<1x64xf32, #tpu.memory_space<vmem>>, vector<1x64xf32>
    %35 = vector.broadcast %34 : vector<1x64xf32> to vector<32x64xf32>
    %36 = arith.addf %33, %35 : vector<32x64xf32>
    %cst_25 = arith.constant 0.000000e+00 : f32
    %37 = vector.broadcast %cst_25 : f32 to vector<32x64xf32>
    %38 = arith.subf %37, %36 : vector<32x64xf32>
    %39 = math.exp %38 : vector<32x64xf32>
    %cst_26 = arith.constant 1.000000e+00 : f32
    %40 = vector.broadcast %cst_26 : f32 to vector<32x64xf32>
    %41 = arith.addf %40, %39 : vector<32x64xf32>
    %42 = tpu.reciprocal %41 {approx = true} : vector<32x64xf32> -> vector<32x64xf32>
    %43 = arith.truncf %42 : vector<32x64xf32> to vector<32x64xbf16>
    %c0_27 = arith.constant 0 : index
    %c0_28 = arith.constant 0 : index
    %44 = vector.load %arg11[%c0_27, %c0_28] : memref<32x64xbf16, #tpu.memory_space<vmem>>, vector<32x64xbf16>
    tpu.vector_store %arg11[%c0_27, %c0_28], %43 {strides = array<i32>} : memref<32x64xbf16, #tpu.memory_space<vmem>>, vector<32x64xbf16>,
    %45 = arith.truncf %13 : vector<32x32xf32> to vector<32x32xbf16>
    %c0_29 = arith.constant 0 : index
    %c0_30 = arith.constant 0 : index
    %46 = vector.load %arg12[%c0_29, %c0_30] : memref<32x32xbf16, #tpu.memory_space<vmem>>, vector<32x32xbf16>
    tpu.vector_store %arg12[%c0_29, %c0_30], %45 {strides = array<i32>} : memref<32x32xbf16, #tpu.memory_space<vmem>>, vector<32x32xbf16>,
    return
  }
  func.func @transform_0(%arg0: i32) -> (i32, i32) {
    %c0_i32 = arith.constant 0 : i32
    %c0_i32_0 = arith.constant 0 : i32
    return %arg0, %c0_i32 : i32, i32
  }
  func.func @transform_1(%arg0: i32) -> (i32, i32) {
    %c0_i32 = arith.constant 0 : i32
    %c0_i32_0 = arith.constant 0 : i32
    return %arg0, %c0_i32 : i32, i32
  }
  func.func @transform_2(%arg0: i32) -> (i32, i32) {
    %c0_i32 = arith.constant 0 : i32
    %c0_i32_0 = arith.constant 0 : i32
    %c0_i32_1 = arith.constant 0 : i32
    return %c0_i32, %c0_i32_0 : i32, i32
  }
  func.func @transform_3(%arg0: i32) -> (i32, i32) {
    %c0_i32 = arith.constant 0 : i32
    %c0_i32_0 = arith.constant 0 : i32
    %c0_i32_1 = arith.constant 0 : i32
    return %c0_i32, %c0_i32_0 : i32, i32
  }
  func.func @transform_4(%arg0: i32) -> (i32, i32) {
    %c0_i32 = arith.constant 0 : i32
    %c0_i32_0 = arith.constant 0 : i32
    %c0_i32_1 = arith.constant 0 : i32
    return %c0_i32, %c0_i32_0 : i32, i32
  }
  func.func @transform_5(%arg0: i32) -> (i32, i32) {
    %c0_i32 = arith.constant 0 : i32
    %c0_i32_0 = arith.constant 0 : i32
    %c0_i32_1 = arith.constant 0 : i32
    return %c0_i32, %c0_i32_0 : i32, i32
  }
  func.func @transform_6(%arg0: i32) -> (i32, i32) {
    %c0_i32 = arith.constant 0 : i32
    %c0_i32_0 = arith.constant 0 : i32
    %c0_i32_1 = arith.constant 0 : i32
    return %c0_i32, %c0_i32_0 : i32, i32
  }
  func.func @transform_7(%arg0: i32) -> (i32, i32) {
    %c0_i32 = arith.constant 0 : i32
    %c0_i32_0 = arith.constant 0 : i32
    %c0_i32_1 = arith.constant 0 : i32
    return %c0_i32, %c0_i32_0 : i32, i32
  }
  func.func @transform_8(%arg0: i32) -> (i32, i32) {
    %c0_i32 = arith.constant 0 : i32
    %c0_i32_0 = arith.constant 0 : i32
    %c0_i32_1 = arith.constant 0 : i32
    return %c0_i32, %c0_i32_0 : i32, i32
  }
  func.func @transform_9(%arg0: i32) -> (i32, i32) {
    %c0_i32 = arith.constant 0 : i32
    %c0_i32_0 = arith.constant 0 : i32
    %c0_i32_1 = arith.constant 0 : i32
    return %c0_i32, %c0_i32_0 : i32, i32
  }
  func.func @transform_10(%arg0: i32) -> (i32, i32) {
    %c0_i32 = arith.constant 0 : i32
    %c0_i32_0 = arith.constant 0 : i32
    return %arg0, %c0_i32 : i32, i32
  }
  func.func @transform_11(%arg0: i32) -> (i32, i32) {
    %c0_i32 = arith.constant 0 : i32
    %c0_i32_0 = arith.constant 0 : i32
    return %arg0, %c0_i32 : i32, i32
  }
}

</mosaic_0001>

<llo_original>
// kernel: tpu_custom_call.1
$region0: #{tpu_custom_call.1}
  #allocation0 [shape = 'u32[]', space=smem, size = 0x4, offset = 0x4, fixed_abs, tag = 'smem constant byte address 0x4 - core index']
  #allocation1 [shape = 'u32[144,128]{1,0:T(1,128)}', space=vmem, size = 0x12000, scoped, tag = 'internal scratch']
  %s0 = inlined_call_operand.vmem [shape: bf16[64,64], index: 0, kind: input, shape index: {}]
  %s1 = inlined_call_operand.vmem [shape: bf16[64,16], index: 1, kind: input, shape index: {}]
  %s2 = inlined_call_operand.vmem [shape: bf16[64,32], index: 2, kind: input, shape index: {}]
  %s3 = inlined_call_operand.vmem [shape: f32[1,32], index: 3, kind: input, shape index: {}]
  %s4 = inlined_call_operand.vmem [shape: bf16[32,32], index: 4, kind: input, shape index: {}]
  %s5 = inlined_call_operand.vmem [shape: f32[1,32], index: 5, kind: input, shape index: {}]
  %s6 = inlined_call_operand.vmem [shape: bf16[16,32], index: 6, kind: input, shape index: {}]
  %s7 = inlined_call_operand.vmem [shape: f32[1,32], index: 7, kind: input, shape index: {}]
  %s8 = inlined_call_operand.vmem [shape: bf16[32,64], index: 8, kind: input, shape index: {}]
  %s9 = inlined_call_operand.vmem [shape: f32[1,64], index: 9, kind: input, shape index: {}]
  %s10 = inlined_call_operand.hbm [shape: bf16[64,64], index: 10, kind: output, shape index: {0}]
  %s11 = inlined_call_operand.vmem [shape: bf16[64,32], index: 11, kind: output, shape index: {1}]
  %12 = xla_tuple %s10, %s11
  %s13 = sld [smem:[#allocation0]]
  $region81: #{tpu_custom_call.1} parent=0
    _
  %s15 = ssub.s32 1, %s13
  %s16 = scalar_select 0, %s15, %s13
  $region1: #{tpu_custom_call.1} parent=0
    #allocation2 [shape = 'u8[16384]{0}', space=vmem, size = 0x4000, scoped, tag = 'output window, operand 0']
    #allocation3 [shape = 's32[2]{0}', space=sflag, size = 0x8, scoped, tag = 'scoped memory for tpu_custom_call.1']
    %17 = vsyncpa [#allocation3], 0
    %s18 = scalar_lea.sflag [#allocation3], 1
    %19 = vsyncpa %s18, 0
    loop: start=0, step=1, limit=4
    $region2: #{tpu_custom_call.1} parent=1 // loop_pre_header
      _
    $region3: #{tpu_custom_call.1} parent=1 // loop_header
      %s21 = sphi 0, %s25
      %p22 = scmp.ge.s32.totalorder %s21, 4
      %s31 = sphi 0, %s33
      %s34 = sphi 0, %s31
      %s35 = sphi 0, %s34
      %s51 = sphi 0, %s35
      %s57 = sphi 0, %s59
      %s60 = sphi 0, %s57
      %s61 = sphi 0, %s60
      %s77 = sphi 0, %s61
      %s81 = sphi 0, %s81
      %s83 = sphi 0, %s81
      %s84 = sphi 0, %s83
      %s98 = sphi 0, %s84
      %s102 = sphi 0, %s102
      %s104 = sphi 0, %s102
      %s105 = sphi 0, %s104
      %s119 = sphi 0, %s105
      %s123 = sphi 0, %s123
      %s125 = sphi 0, %s123
      %s126 = sphi 0, %s125
      %s140 = sphi 0, %s126
      %s144 = sphi 0, %s144
      %s146 = sphi 0, %s144
      %s147 = sphi 0, %s146
      %s161 = sphi 0, %s147
      %s165 = sphi 0, %s165
      %s167 = sphi 0, %s165
      %s168 = sphi 0, %s167
      %s182 = sphi 0, %s168
      %s186 = sphi 0, %s186
      %s188 = sphi 0, %s186
      %s189 = sphi 0, %s188
      %s203 = sphi 0, %s189
      %s207 = sphi 0, %s207
      %s209 = sphi 0, %s207
      %s210 = sphi 0, %s209
      %s224 = sphi 0, %s210
      %s228 = sphi 0, %s228
      %s230 = sphi 0, %s228
      %s231 = sphi 0, %s230
      %s245 = sphi 0, %s231
      %s251 = sphi 0, %s253
      %s254 = sphi 0, %s251
      %s255 = sphi 0, %s254
      %s271 = sphi 0, %s255
      %s277 = sphi 0, %s279
      %s280 = sphi 0, %s277
      %s281 = sphi 0, %s280
      %s297 = sphi 0, %s281
    $region4: #{tpu_custom_call.1} parent=1 // loop_header_branch
      %24 = sbr.rel (%p22) target = $region8
    $region5: #{tpu_custom_call.1} parent=1 // loop_body
      %s26 = ssub.s32 %s21, 1
      %s27 = ssub.s32 %s21, 2
      %s28 = sadd.s32 %s21, 1
      %s29 = ssub.s32 %s21, %s28
      %p30 = scmp.eq.s32.totalorder %s29, 0
      %s32 = sadd.s32 %s31, 1
      %s33 = scalar_select %p30, %s31, %s32
      %p36 = pneg %p30
      %p37 = scmp.eq.s32.totalorder %s21, 1
      %p38 = por %p36, %p37
      %p39 = scmp.ne.s32.totalorder %s31, %s34
      %p40 = scmp.eq.s32.totalorder %s21, 0
      %p41 = por %p39, %p40
      %p42 = scmp.ne.s32.totalorder %s31, %s34
      %p43 = scmp.eq.s32.totalorder %s26, 1
      %p44 = por %p42, %p43
      %p45 = scmp.ne.s32.totalorder %s34, %s35
      %p46 = scmp.eq.s32.totalorder %s26, 0
      %p47 = por %p45, %p46
      %p48 = scmp.ne.s32.totalorder %s34, %s35
      %p49 = scmp.eq.s32.totalorder %s27, 1
      %p50 = por %p48, %p49
      %p52 = scmp.ne.s32.totalorder %s35, %s51
      %p53 = scmp.eq.s32.totalorder %s27, 0
      %p54 = por %p52, %p53
      %s55 = ssub.s32 %s21, %s28
      %p56 = scmp.eq.s32.totalorder %s55, 0
      %s58 = sadd.s32 %s57, 1
      %s59 = scalar_select %p56, %s57, %s58
      %p62 = pneg %p56
      %p63 = scmp.eq.s32.totalorder %s21, 1
      %p64 = por %p62, %p63
      %p65 = scmp.ne.s32.totalorder %s57, %s60
      %p66 = scmp.eq.s32.totalorder %s21, 0
      %p67 = por %p65, %p66
      %p68 = scmp.ne.s32.totalorder %s57, %s60
      %p69 = scmp.eq.s32.totalorder %s26, 1
      %p70 = por %p68, %p69
      %p71 = scmp.ne.s32.totalorder %s60, %s61
      %p72 = scmp.eq.s32.totalorder %s26, 0
      %p73 = por %p71, %p72
      %p74 = scmp.ne.s32.totalorder %s60, %s61
      %p75 = scmp.eq.s32.totalorder %s27, 1
      %p76 = por %p74, %p75
      %p78 = scmp.ne.s32.totalorder %s61, %s77
      %p79 = scmp.eq.s32.totalorder %s27, 0
      %p80 = por %p78, %p79
      %s82 = sadd.s32 %s81, 1
      %p85 = scmp.eq.s32.totalorder %s21, 1
      %p86 = scmp.ne.s32.totalorder %s81, %s83
      %p87 = scmp.eq.s32.totalorder %s21, 0
      %p88 = por %p86, %p87
      %p89 = scmp.ne.s32.totalorder %s81, %s83
      %p90 = scmp.eq.s32.totalorder %s26, 1
      %p91 = por %p89, %p90
      %p92 = scmp.ne.s32.totalorder %s83, %s84
      %p93 = scmp.eq.s32.totalorder %s26, 0
      %p94 = por %p92, %p93
      %p95 = scmp.ne.s32.totalorder %s83, %s84
      %p96 = scmp.eq.s32.totalorder %s27, 1
      %p97 = por %p95, %p96
      %p99 = scmp.ne.s32.totalorder %s84, %s98
      %p100 = scmp.eq.s32.totalorder %s27, 0
      %p101 = por %p99, %p100
      %s103 = sadd.s32 %s102, 1
      %p106 = scmp.eq.s32.totalorder %s21, 1
      %p107 = scmp.ne.s32.totalorder %s102, %s104
      %p108 = scmp.eq.s32.totalorder %s21, 0
      %p109 = por %p107, %p108
      %p110 = scmp.ne.s32.totalorder %s102, %s104
      %p111 = scmp.eq.s32.totalorder %s26, 1
      %p112 = por %p110, %p111
      %p113 = scmp.ne.s32.totalorder %s104, %s105
      %p114 = scmp.eq.s32.totalorder %s26, 0
      %p115 = por %p113, %p114
      %p116 = scmp.ne.s32.totalorder %s104, %s105
      %p117 = scmp.eq.s32.totalorder %s27, 1
      %p118 = por %p116, %p117
      %p120 = scmp.ne.s32.totalorder %s105, %s119
      %p121 = scmp.eq.s32.totalorder %s27, 0
      %p122 = por %p120, %p121
      %s124 = sadd.s32 %s123, 1
      %p127 = scmp.eq.s32.totalorder %s21, 1
      %p128 = scmp.ne.s32.totalorder %s123, %s125
      %p129 = scmp.eq.s32.totalorder %s21, 0
      %p130 = por %p128, %p129
      %p131 = scmp.ne.s32.totalorder %s123, %s125
      %p132 = scmp.eq.s32.totalorder %s26, 1
      %p133 = por %p131, %p132
      %p134 = scmp.ne.s32.totalorder %s125, %s126
      %p135 = scmp.eq.s32.totalorder %s26, 0
      %p136 = por %p134, %p135
      %p137 = scmp.ne.s32.totalorder %s125, %s126
      %p138 = scmp.eq.s32.totalorder %s27, 1
      %p139 = por %p137, %p138
      %p141 = scmp.ne.s32.totalorder %s126, %s140
      %p142 = scmp.eq.s32.totalorder %s27, 0
      %p143 = por %p141, %p142
      %s145 = sadd.s32 %s144, 1
      %p148 = scmp.eq.s32.totalorder %s21, 1
      %p149 = scmp.ne.s32.totalorder %s144, %s146
      %p150 = scmp.eq.s32.totalorder %s21, 0
      %p151 = por %p149, %p150
      %p152 = scmp.ne.s32.totalorder %s144, %s146
      %p153 = scmp.eq.s32.totalorder %s26, 1
      %p154 = por %p152, %p153
      %p155 = scmp.ne.s32.totalorder %s146, %s147
      %p156 = scmp.eq.s32.totalorder %s26, 0
      %p157 = por %p155, %p156
      %p158 = scmp.ne.s32.totalorder %s146, %s147
      %p159 = scmp.eq.s32.totalorder %s27, 1
      %p160 = por %p158, %p159
      %p162 = scmp.ne.s32.totalorder %s147, %s161
      %p163 = scmp.eq.s32.totalorder %s27, 0
      %p164 = por %p162, %p163
      %s166 = sadd.s32 %s165, 1
      %p169 = scmp.eq.s32.totalorder %s21, 1
      %p170 = scmp.ne.s32.totalorder %s165, %s167
      %p171 = scmp.eq.s32.totalorder %s21, 0
      %p172 = por %p170, %p171
      %p173 = scmp.ne.s32.totalorder %s165, %s167
      %p174 = scmp.eq.s32.totalorder %s26, 1
      %p175 = por %p173, %p174
      %p176 = scmp.ne.s32.totalorder %s167, %s168
      %p177 = scmp.eq.s32.totalorder %s26, 0
      %p178 = por %p176, %p177
      %p179 = scmp.ne.s32.totalorder %s167, %s168
      %p180 = scmp.eq.s32.totalorder %s27, 1
      %p181 = por %p179, %p180
      %p183 = scmp.ne.s32.totalorder %s168, %s182
      %p184 = scmp.eq.s32.totalorder %s27, 0
      %p185 = por %p183, %p184
      %s187 = sadd.s32 %s186, 1
      %p190 = scmp.eq.s32.totalorder %s21, 1
      %p191 = scmp.ne.s32.totalorder %s186, %s188
      %p192 = scmp.eq.s32.totalorder %s21, 0
      %p193 = por %p191, %p192
      %p194 = scmp.ne.s32.totalorder %s186, %s188
      %p195 = scmp.eq.s32.totalorder %s26, 1
      %p196 = por %p194, %p195
      %p197 = scmp.ne.s32.totalorder %s188, %s189
      %p198 = scmp.eq.s32.totalorder %s26, 0
      %p199 = por %p197, %p198
      %p200 = scmp.ne.s32.totalorder %s188, %s189
      %p201 = scmp.eq.s32.totalorder %s27, 1
      %p202 = por %p200, %p201
      %p204 = scmp.ne.s32.totalorder %s189, %s203
      %p205 = scmp.eq.s32.totalorder %s27, 0
      %p206 = por %p204, %p205
      %s208 = sadd.s32 %s207, 1
      %p211 = scmp.eq.s32.totalorder %s21, 1
      %p212 = scmp.ne.s32.totalorder %s207, %s209
      %p213 = scmp.eq.s32.totalorder %s21, 0
      %p214 = por %p212, %p213
      %p215 = scmp.ne.s32.totalorder %s207, %s209
      %p216 = scmp.eq.s32.totalorder %s26, 1
      %p217 = por %p215, %p216
      %p218 = scmp.ne.s32.totalorder %s209, %s210
      %p219 = scmp.eq.s32.totalorder %s26, 0
      %p220 = por %p218, %p219
      %p221 = scmp.ne.s32.totalorder %s209, %s210
      %p222 = scmp.eq.s32.totalorder %s27, 1
      %p223 = por %p221, %p222
      %p225 = scmp.ne.s32.totalorder %s210, %s224
      %p226 = scmp.eq.s32.totalorder %s27, 0
      %p227 = por %p225, %p226
      %s229 = sadd.s32 %s228, 1
      %p232 = scmp.eq.s32.totalorder %s21, 1
      %p233 = scmp.ne.s32.totalorder %s228, %s230
      %p234 = scmp.eq.s32.totalorder %s21, 0
      %p235 = por %p233, %p234
      %p236 = scmp.ne.s32.totalorder %s228, %s230
      %p237 = scmp.eq.s32.totalorder %s26, 1
      %p238 = por %p236, %p237
      %p239 = scmp.ne.s32.totalorder %s230, %s231
      %p240 = scmp.eq.s32.totalorder %s26, 0
      %p241 = por %p239, %p240
      %p242 = scmp.ne.s32.totalorder %s230, %s231
      %p243 = scmp.eq.s32.totalorder %s27, 1
      %p244 = por %p242, %p243
      %p246 = scmp.ne.s32.totalorder %s231, %s245
      %p247 = scmp.eq.s32.totalorder %s27, 0
      %p248 = por %p246, %p247
      %s249 = ssub.s32 %s21, %s28
      %p250 = scmp.eq.s32.totalorder %s249, 0
      %s252 = sadd.s32 %s251, 1
      %s253 = scalar_select %p250, %s251, %s252
      %p256 = pneg %p250
      %p257 = scmp.eq.s32.totalorder %s21, 1
      %p258 = por %p256, %p257
      %p259 = scmp.ne.s32.totalorder %s251, %s254
      %p260 = scmp.eq.s32.totalorder %s21, 0
      %p261 = por %p259, %p260
      %p262 = scmp.ne.s32.totalorder %s251, %s254
      %p263 = scmp.eq.s32.totalorder %s26, 1
      %p264 = por %p262, %p263
      %p265 = scmp.ne.s32.totalorder %s254, %s255
      %p266 = scmp.eq.s32.totalorder %s26, 0
      %p267 = por %p265, %p266
      %p268 = scmp.ne.s32.totalorder %s254, %s255
      %p269 = scmp.eq.s32.totalorder %s27, 1
      %p270 = por %p268, %p269
      %p272 = scmp.ne.s32.totalorder %s255, %s271
      %p273 = scmp.eq.s32.totalorder %s27, 0
      %p274 = por %p272, %p273
      %s275 = ssub.s32 %s21, %s28
      %p276 = scmp.eq.s32.totalorder %s275, 0
      %s278 = sadd.s32 %s277, 1
      %s279 = scalar_select %p276, %s277, %s278
      %p282 = pneg %p276
      %p283 = scmp.eq.s32.totalorder %s21, 1
      %p284 = por %p282, %p283
      %p285 = scmp.ne.s32.totalorder %s277, %s280
      %p286 = scmp.eq.s32.totalorder %s21, 0
      %p287 = por %p285, %p286
      %p288 = scmp.ne.s32.totalorder %s277, %s280
      %p289 = scmp.eq.s32.totalorder %s26, 1
      %p290 = por %p288, %p289
      %p291 = scmp.ne.s32.totalorder %s280, %s281
      %p292 = scmp.eq.s32.totalorder %s26, 0
      %p293 = por %p291, %p292
      %p294 = scmp.ne.s32.totalorder %s280, %s281
      %p295 = scmp.eq.s32.totalorder %s27, 1
      %p296 = por %p294, %p295
      %p298 = scmp.ne.s32.totalorder %s281, %s297
      %p299 = scmp.eq.s32.totalorder %s27, 0
      %p300 = por %p298, %p299
      %p301 = scmp.le.s32.totalorder 1, %s21
      %p302 = scmp.lt.s32.totalorder %s21, 3
      %p303 = pnand %p301, %p302
      %p304 = pneg %p303
      // Predicated region
      $region9: #{tpu_custom_call.1} parent=5 // pred_check
        _
      $region10: #{tpu_custom_call.1} parent=5 // pred_check_branch
        %306 = sbr.rel (%p303) target = $region12
      $region11: #{tpu_custom_call.1} parent=5 // pred_region
        %s307 = ssub.s32 %s21, 1
        // Predicated region
        $region13: #{tpu_custom_call.1} parent=11 // pred_check
          %p308 = pneg %p94
        $region14: #{tpu_custom_call.1} parent=11 // pred_check_branch
          %310 = sbr.rel (%p308) target = $region16
        $region15: #{tpu_custom_call.1} parent=11 // pred_region
          _
        $region16: #{tpu_custom_call.1} parent=11 // pred_fallthru
          _
        // Predicated region
        $region17: #{tpu_custom_call.1} parent=11 // pred_check
          %p311 = pneg %p115
        $region18: #{tpu_custom_call.1} parent=11 // pred_check_branch
          %313 = sbr.rel (%p311) target = $region20
        $region19: #{tpu_custom_call.1} parent=11 // pred_region
          _
        $region20: #{tpu_custom_call.1} parent=11 // pred_fallthru
          _
        // Predicated region
        $region21: #{tpu_custom_call.1} parent=11 // pred_check
          %p314 = pneg %p136
        $region22: #{tpu_custom_call.1} parent=11 // pred_check_branch
          %316 = sbr.rel (%p314) target = $region24
        $region23: #{tpu_custom_call.1} parent=11 // pred_region
          _
        $region24: #{tpu_custom_call.1} parent=11 // pred_fallthru
          _
        // Predicated region
        $region25: #{tpu_custom_call.1} parent=11 // pred_check
          %p317 = pneg %p157
        $region26: #{tpu_custom_call.1} parent=11 // pred_check_branch
          %319 = sbr.rel (%p317) target = $region28
        $region27: #{tpu_custom_call.1} parent=11 // pred_region
          _
        $region28: #{tpu_custom_call.1} parent=11 // pred_fallthru
          _
        // Predicated region
        $region29: #{tpu_custom_call.1} parent=11 // pred_check
          %p320 = pneg %p178
        $region30: #{tpu_custom_call.1} parent=11 // pred_check_branch
          %322 = sbr.rel (%p320) target = $region32
        $region31: #{tpu_custom_call.1} parent=11 // pred_region
          _
        $region32: #{tpu_custom_call.1} parent=11 // pred_fallthru
          _
        // Predicated region
        $region33: #{tpu_custom_call.1} parent=11 // pred_check
          %p323 = pneg %p199
        $region34: #{tpu_custom_call.1} parent=11 // pred_check_branch
          %325 = sbr.rel (%p323) target = $region36
        $region35: #{tpu_custom_call.1} parent=11 // pred_region
          _
        $region36: #{tpu_custom_call.1} parent=11 // pred_fallthru
          _
        // Predicated region
        $region37: #{tpu_custom_call.1} parent=11 // pred_check
          %p326 = pneg %p220
        $region38: #{tpu_custom_call.1} parent=11 // pred_check_branch
          %328 = sbr.rel (%p326) target = $region40
        $region39: #{tpu_custom_call.1} parent=11 // pred_region
          _
        $region40: #{tpu_custom_call.1} parent=11 // pred_fallthru
          _
        // Predicated region
        $region41: #{tpu_custom_call.1} parent=11 // pred_check
          %p329 = pneg %p241
        $region42: #{tpu_custom_call.1} parent=11 // pred_check_branch
          %331 = sbr.rel (%p329) target = $region44
        $region43: #{tpu_custom_call.1} parent=11 // pred_region
          _
        $region44: #{tpu_custom_call.1} parent=11 // pred_fallthru
          _
      $region12: #{tpu_custom_call.1} parent=5 // pred_fallthru
        _
      %p332 = scmp.lt.s32.totalorder %s21, 2
      // Predicated region
      $region45: #{tpu_custom_call.1} parent=5 // pred_check
        %p333 = pneg %p332
      $region46: #{tpu_custom_call.1} parent=5 // pred_check_branch
        %335 = sbr.rel (%p333) target = $region48
      $region47: #{tpu_custom_call.1} parent=5 // pred_region
        // Predicated region
        $region49: #{tpu_custom_call.1} parent=47 // pred_check
          %p336 = pneg %p41
        $region50: #{tpu_custom_call.1} parent=47 // pred_check_branch
          %338 = sbr.rel (%p336) target = $region52
        $region51: #{tpu_custom_call.1} parent=47 // pred_region
          %s339 = smul.u32 4, %s21
          %p340 = scmp.lt.s32.totalorder %s339, 7
          %s341 = scalar_select %p340, %s339, 7
          %s342 = smul.addr %s341, 4
          %s343 = scalar_lea.vmem %s0, %s342
          %s344 = smul.u32 4, %s21
        $region52: #{tpu_custom_call.1} parent=47 // pred_fallthru
          _
        // Predicated region
        $region53: #{tpu_custom_call.1} parent=47 // pred_check
          %p345 = pneg %p67
        $region54: #{tpu_custom_call.1} parent=47 // pred_check_branch
          %347 = sbr.rel (%p345) target = $region56
        $region55: #{tpu_custom_call.1} parent=47 // pred_region
          %s348 = smul.u32 4, %s21
          %p349 = scmp.lt.s32.totalorder %s348, 7
          %s350 = scalar_select %p349, %s348, 7
          %s351 = smul.addr %s350, 4
          %s352 = scalar_lea.vmem %s1, %s351
          %s353 = smul.u32 4, %s21
        $region56: #{tpu_custom_call.1} parent=47 // pred_fallthru
          _
      $region48: #{tpu_custom_call.1} parent=5 // pred_fallthru
        _
      %p354 = scmp.le.s32.totalorder 1, %s21
      %p355 = scmp.lt.s32.totalorder %s21, 3
      %p356 = pnand %p354, %p355
      %p357 = pneg %p356
      // Predicated region
      $region57: #{tpu_custom_call.1} parent=5 // pred_check
        _
      $region58: #{tpu_custom_call.1} parent=5 // pred_check_branch
        %359 = sbr.rel (%p356) target = $region60
      $region59: #{tpu_custom_call.1} parent=5 // pred_region
        %s360 = ssub.s32 %s21, 1
        %s361 = smul.u32 4, %s26
        %p362 = scmp.lt.s32.totalorder %s361, 7
        %s363 = scalar_select %p362, %s361, 7
        %s364 = smul.addr %s363, 4
        %s365 = scalar_lea.vmem %s0, %s364
        %p366 = pneg %p47
        %p367 = pneg %p44
        %s368 = smul.u32 4, %s26
        %p369 = scmp.lt.s32.totalorder %s368, 7
        %s370 = scalar_select %p369, %s368, 7
        %s371 = smul.addr %s370, 4
        %s372 = scalar_lea.vmem %s1, %s371
        %p373 = pneg %p73
        %p374 = pneg %p70
        %p375 = pneg %p94
        %p376 = pneg %p91
        %p377 = pneg %p115
        %p378 = pneg %p112
        %p379 = pneg %p136
        %p380 = pneg %p133
        %p381 = pneg %p157
        %p382 = pneg %p154
        %p383 = pneg %p178
        %p384 = pneg %p175
        %p385 = pneg %p199
        %p386 = pneg %p196
        %p387 = pneg %p220
        %p388 = pneg %p217
        %p389 = pneg %p241
        %p390 = pneg %p238
        %p391 = pneg %p267
        %p392 = pneg %p264
        %s393 = sand.u32 %s254, 1
        %s394 = scalar_lea.sflag [#allocation3], %s393
        %s395 = sand.u32 %s254, 1
        %s396 = smul.addr %s395, 16
        %s397 = scalar_lea.vmem [#allocation2], %s396
        %p398 = pneg %p293
        %p399 = pneg %p290
        %s400 = smul.u32 4, %s26
        %p401 = scmp.lt.s32.totalorder %s400, 7
        %s402 = scalar_select %p401, %s400, 7
        %s403 = smul.addr %s402, 4
        %s404 = scalar_lea.vmem %s11, %s403
        %s405 = smul.u32 4, %s26
        %p406 = scmp.lt.s32.totalorder %s405, 7
        %s407 = scalar_select %p406, %s405, 7
        %s408 = smul.addr %s407, 4
        %s409 = scalar_lea.vmem %s0, %s408
        %s410 = smul.u32 4, %s26
        %s411 = smul.u32 4, %s26
        %p412 = scmp.lt.s32.totalorder %s411, 7
        %s413 = scalar_select %p412, %s411, 7
        %s414 = smul.addr %s413, 4
        %s415 = scalar_lea.vmem %s1, %s414
        %s416 = smul.u32 4, %s26
        %s417 = smul.u32 4, %s26
        %s418 = smul.u32 4, %s26
        %p419 = scmp.lt.s32.totalorder %s418, 7
        %s420 = scalar_select %p419, %s418, 7
        %s421 = smul.addr %s420, 4
        %s422 = scalar_lea.vmem %s11, %s421
        %s423 = smul.u32 4, %s26
        %v425 = vld [vmem:[%s409] sm:$0xf]
        %v426 = vld [vmem:[%s409 + $0x4] sm:$0xf]
        %v427 = vld [vmem:[%s409 + $0x8] sm:$0xf]
        %v428 = vld [vmem:[%s409 + $0xc] sm:$0xf]
        %v429 = vld [vmem:[%s2] sm:$0xf]
        %v430 = vld [vmem:[%s2 + $0x4] sm:$0xf]
        %v431 = vld [vmem:[%s2 + $0x8] sm:$0xf]
        %v432 = vld [vmem:[%s2 + $0xc] sm:$0xf]
        %v433 = vld [vmem:[%s2 + $0x10] sm:$0xf]
        %v434 = vld [vmem:[%s2 + $0x14] sm:$0xf]
        %v435 = vld [vmem:[%s2 + $0x18] sm:$0xf]
        %v436 = vld [vmem:[%s2 + $0x1c] sm:$0xf]
        %v437 = vld [vmem:[%s3] sm:$0x1]
        %v439 = vlaneseq
        %v440 = vshrl.u32 %v439, 7
        %v441 = vsub.s32 0, %v440
        %v442 = vrot.slane %v437, %v441
        %v448 = vunpack.c.l.b16 %v425
        %v449 = vunpack.c.l.b16 %v426
        %v450 = vunpack.c.l.b16 %v427
        %v451 = vunpack.c.l.b16 %v428
        %v452 = vpack.c.b16 %v449, %v448
        %v453 = vpack.c.b16 %v451, %v450
        %v462 = vunpack.c.l.b16 %v429
        %v463 = vunpack.c.l.b16 %v430
        %v464 = vunpack.c.l.b16 %v431
        %v465 = vunpack.c.l.b16 %v432
        %v466 = vunpack.c.l.b16 %v433
        %v467 = vunpack.c.l.b16 %v434
        %v468 = vunpack.c.l.b16 %v435
        %v469 = vunpack.c.l.b16 %v436
        %v470 = vpack.c.b16 %v463, %v462
        %v471 = vpack.c.b16 %v465, %v464
        %v472 = vpack.c.b16 %v467, %v466
        %v473 = vpack.c.b16 %v469, %v468
        %vm478 = vcmask 523264
        %v480 = vsel %vm478, %v452, 0
        %v483 = vsel %vm478, %v453, 0
        %485 = vmatprep.subr.bf16.mxu0 0
        %486 = vmatpush1.bf16.msra.mxu0 %v470
        %487 = vmatprep.subr.bf16.mxu0 0
        %488 = vmatpush1.bf16.msra.mxu0 %v471
        %489 = vmatprep.subr.bf16.mxu0 0
        %490 = vmatpush1.bf16.msra.mxu0 %v472
        %491 = vmatprep.subr.bf16.mxu0 0
        %492 = vmatpush1.bf16.msra.mxu0 %v473
        %493 = vmatprep.subr.bf16.mxu0 0
        %494 = vmatpush1.bf16.msra.mxu0 0
        %495 = vmatprep.subr.bf16.mxu0 0
        %496 = vmatpush1.bf16.msra.mxu0 0
        %497 = vmatprep.subr.bf16.mxu0 0
        %498 = vmatpush1.bf16.msra.mxu0 0
        %499 = vmatprep.subr.bf16.mxu0 0
        %500 = vmatpush1.bf16.msra.mxu0 0
        %501 = vmatprep.subr.bf16.mxu0 0
        %502 = vmatpush1.bf16.msra.mxu0 0
        %503 = vmatprep.subr.bf16.mxu0 0
        %504 = vmatpush1.bf16.msra.mxu0 0
        %505 = vmatprep.subr.bf16.mxu0 0
        %506 = vmatpush1.bf16.msra.mxu0 0
        %507 = vmatprep.subr.bf16.mxu0 0
        %508 = vmatpush1.bf16.msra.mxu0 0
        %509 = vmatprep.subr.bf16.mxu0 0
        %510 = vmatpush1.bf16.msra.mxu0 0
        %511 = vmatprep.subr.bf16.mxu0 0
        %512 = vmatpush1.bf16.msra.mxu0 0
        %513 = vmatprep.subr.bf16.mxu0 0
        %514 = vmatpush1.bf16.msra.mxu0 0
        %515 = vmatprep.subr.bf16.mxu0 0
        %516 = vmatpush1.bf16.msra.mxu0 0
        %517 = vmatprep.mubr.bf16.mxu0 0
        %518 = vmatmul.mubr.bf16.gmra.mrb[0].mxu0 %v480
        %v519 = vpop.f32.mrb[0].mxu0
        %v520 = vadd.f32 %v442, %v519
        %v521 = vpop.f32.mrb[0].mxu0
        %v522 = vpop.f32.mrb[0].mxu0
        %v523 = vadd.f32 %v442, %v522
        %v524 = vpop.f32.mrb[0].mxu0
        %525 = vmatprep.mubr.bf16.mxu0 0
        %526 = vmatmul.mubr.bf16.gmra.mrb[0].mxu0 %v483
        %v527 = vpop.f32.mrb[0].mxu0
        %v528 = vadd.f32 %v442, %v527
        %v529 = vpop.f32.mrb[0].mxu0
        %v530 = vpop.f32.mrb[0].mxu0
        %v531 = vadd.f32 %v442, %v530
        %v532 = vpop.f32.mrb[0].mxu0
        %533 = vdwg.mxu0
        %v534 = vmax.f32 %v520, 0.0
        %v535 = vmax.f32 %v523, 0.0
        %v536 = vmax.f32 %v528, 0.0
        %v537 = vmax.f32 %v531, 0.0
        %v538 = vpack.c.bf16 %v535, %v534
        %v539 = vpack.c.bf16 %v537, %v536
        %v540 = vld [vmem:[%s4] sm:$0xf]
        %v541 = vld [vmem:[%s4 + $0x4] sm:$0xf]
        %v542 = vld [vmem:[%s4 + $0x8] sm:$0xf]
        %v543 = vld [vmem:[%s4 + $0xc] sm:$0xf]
        %v544 = vld [vmem:[%s5] sm:$0x1]
        %v546 = vlaneseq
        %v547 = vshrl.u32 %v546, 7
        %v548 = vsub.s32 0, %v547
        %v549 = vrot.slane %v544, %v548
        %v555 = vunpack.c.l.b16 %v540
        %v556 = vunpack.c.l.b16 %v541
        %v557 = vunpack.c.l.b16 %v542
        %v558 = vunpack.c.l.b16 %v543
        %v559 = vpack.c.b16 %v556, %v555
        %v560 = vpack.c.b16 %v558, %v557
        %vm563 = vcmask 261120
        %v565 = vsel %vm563, %v538, 0
        %v568 = vsel %vm563, %v539, 0
        %570 = vmatprep.subr.bf16.mxu0 0
        %571 = vmatpush1.bf16.msra.mxu0 %v559
        %572 = vmatprep.subr.bf16.mxu0 0
        %573 = vmatpush1.bf16.msra.mxu0 %v560
        %574 = vmatprep.subr.bf16.mxu0 0
        %575 = vmatpush1.bf16.msra.mxu0 0
        %576 = vmatprep.subr.bf16.mxu0 0
        %577 = vmatpush1.bf16.msra.mxu0 0
        %578 = vmatprep.subr.bf16.mxu0 0
        %579 = vmatpush1.bf16.msra.mxu0 0
        %580 = vmatprep.subr.bf16.mxu0 0
        %581 = vmatpush1.bf16.msra.mxu0 0
        %582 = vmatprep.subr.bf16.mxu0 0
        %583 = vmatpush1.bf16.msra.mxu0 0
        %584 = vmatprep.subr.bf16.mxu0 0
        %585 = vmatpush1.bf16.msra.mxu0 0
        %586 = vmatprep.subr.bf16.mxu0 0
        %587 = vmatpush1.bf16.msra.mxu0 0
        %588 = vmatprep.subr.bf16.mxu0 0
        %589 = vmatpush1.bf16.msra.mxu0 0
        %590 = vmatprep.subr.bf16.mxu0 0
        %591 = vmatpush1.bf16.msra.mxu0 0
        %592 = vmatprep.subr.bf16.mxu0 0
        %593 = vmatpush1.bf16.msra.mxu0 0
        %594 = vmatprep.subr.bf16.mxu0 0
        %595 = vmatpush1.bf16.msra.mxu0 0
        %596 = vmatprep.subr.bf16.mxu0 0
        %597 = vmatpush1.bf16.msra.mxu0 0
        %598 = vmatprep.subr.bf16.mxu0 0
        %599 = vmatpush1.bf16.msra.mxu0 0
        %600 = vmatprep.subr.bf16.mxu0 0
        %601 = vmatpush1.bf16.msra.mxu0 0
        %602 = vmatprep.mubr.bf16.mxu0 0
        %603 = vmatmul.mubr.bf16.gmra.mrb[0].mxu0 %v565
        %v604 = vpop.f32.mrb[0].mxu0
        %v605 = vadd.f32 %v549, %v604
        %v606 = vpop.f32.mrb[0].mxu0
        %v607 = vpop.f32.mrb[0].mxu0
        %v608 = vadd.f32 %v549, %v607
        %v609 = vpop.f32.mrb[0].mxu0
        %610 = vmatprep.mubr.bf16.mxu0 0
        %611 = vmatmul.mubr.bf16.gmra.mrb[0].mxu0 %v568
        %v612 = vpop.f32.mrb[0].mxu0
        %v613 = vadd.f32 %v549, %v612
        %v614 = vpop.f32.mrb[0].mxu0
        %v615 = vpop.f32.mrb[0].mxu0
        %v616 = vadd.f32 %v549, %v615
        %v617 = vpop.f32.mrb[0].mxu0
        %618 = vdwg.mxu0
        %v619 = vmul.f32 %v605, 0.5
        %v620 = vmul.f32 %v608, 0.5
        %v621 = vmul.f32 %v613, 0.5
        %v622 = vmul.f32 %v616, 0.5
        %v623 = vmul.f32 %v619, 1.442695
        %v624 = vpow.pop %v623
        %v625 = vmul.f32 %v620, 1.442695
        %v626 = vpow.pop %v625
        %v627 = vmul.f32 %v621, 1.442695
        %v628 = vpow.pop %v627
        %v629 = vmul.f32 %v622, 1.442695
        %v630 = vpow.pop %v629
        %v631 = vld [vmem:[%s415] sm:$0xf]
        %v632 = vld [vmem:[%s415 + $0x4] sm:$0xf]
        %v633 = vld [vmem:[%s415 + $0x8] sm:$0xf]
        %v634 = vld [vmem:[%s415 + $0xc] sm:$0xf]
        %v635 = vunpack.c.l.bf16 %v631
        %v636 = vunpack.c.l.bf16 %v632
        %v637 = vunpack.c.l.bf16 %v633
        %v638 = vunpack.c.l.bf16 %v634
        %643 = vrot.lane.b32.xlu0 %v635, 16
        %v644 = vpop.permute.xlu0 %643
        %645 = vrot.lane.b32.xlu0 %v636, 16
        %v646 = vpop.permute.xlu0 %645
        %647 = vrot.lane.b32.xlu0 %v637, 16
        %v648 = vpop.permute.xlu0 %647
        %649 = vrot.lane.b32.xlu0 %v638, 16
        %v650 = vpop.permute.xlu0 %649
        %v655 = vmul.f32 %v624, %v644
        %v656 = vmul.f32 %v626, %v646
        %v657 = vmul.f32 %v628, %v648
        %v658 = vmul.f32 %v630, %v650
        %663 = vrot.lane.b32.xlu0 %v655, 112
        %v664 = vpop.permute.xlu0 %663
        %665 = vrot.lane.b32.xlu0 %v656, 112
        %v666 = vpop.permute.xlu0 %665
        %667 = vrot.lane.b32.xlu0 %v657, 112
        %v668 = vpop.permute.xlu0 %667
        %669 = vrot.lane.b32.xlu0 %v658, 112
        %v670 = vpop.permute.xlu0 %669
        %v675 = vadd.f32 %v605, %v664
        %v676 = vadd.f32 %v608, %v666
        %v677 = vadd.f32 %v613, %v668
        %v678 = vadd.f32 %v616, %v670
        %v679 = vpack.c.bf16 %v676, %v675
        %v680 = vpack.c.bf16 %v678, %v677
        %v681 = vld [vmem:[%s6] sm:$0xf]
        %v682 = vld [vmem:[%s6 + $0x4] sm:$0xf]
        %v683 = vld [vmem:[%s7] sm:$0x1]
        %v685 = vlaneseq
        %v686 = vshrl.u32 %v685, 7
        %v687 = vsub.s32 0, %v686
        %v688 = vrot.slane %v683, %v687
        %v692 = vunpack.c.l.b16 %v681
        %v693 = vunpack.c.l.b16 %v682
        %v694 = vpack.c.b16 %v693, %v692
        %vm696 = vcmask 130048
        %v698 = vsel %vm696, %v679, 0
        %v701 = vsel %vm696, %v680, 0
        %703 = vmatprep.subr.bf16.mxu0 0
        %704 = vmatpush1.bf16.msra.mxu0 %v694
        %705 = vmatprep.subr.bf16.mxu0 0
        %706 = vmatpush1.bf16.msra.mxu0 0
        %707 = vmatprep.subr.bf16.mxu0 0
        %708 = vmatpush1.bf16.msra.mxu0 0
        %709 = vmatprep.subr.bf16.mxu0 0
        %710 = vmatpush1.bf16.msra.mxu0 0
        %711 = vmatprep.subr.bf16.mxu0 0
        %712 = vmatpush1.bf16.msra.mxu0 0
        %713 = vmatprep.subr.bf16.mxu0 0
        %714 = vmatpush1.bf16.msra.mxu0 0
        %715 = vmatprep.subr.bf16.mxu0 0
        %716 = vmatpush1.bf16.msra.mxu0 0
        %717 = vmatprep.subr.bf16.mxu0 0
        %718 = vmatpush1.bf16.msra.mxu0 0
        %719 = vmatprep.subr.bf16.mxu0 0
        %720 = vmatpush1.bf16.msra.mxu0 0
        %721 = vmatprep.subr.bf16.mxu0 0
        %722 = vmatpush1.bf16.msra.mxu0 0
        %723 = vmatprep.subr.bf16.mxu0 0
        %724 = vmatpush1.bf16.msra.mxu0 0
        %725 = vmatprep.subr.bf16.mxu0 0
        %726 = vmatpush1.bf16.msra.mxu0 0
        %727 = vmatprep.subr.bf16.mxu0 0
        %728 = vmatpush1.bf16.msra.mxu0 0
        %729 = vmatprep.subr.bf16.mxu0 0
        %730 = vmatpush1.bf16.msra.mxu0 0
        %731 = vmatprep.subr.bf16.mxu0 0
        %732 = vmatpush1.bf16.msra.mxu0 0
        %733 = vmatprep.subr.bf16.mxu0 0
        %734 = vmatpush1.bf16.msra.mxu0 0
        %735 = vmatprep.mubr.bf16.mxu0 0
        %736 = vmatmul.mubr.bf16.gmra.mrb[0].mxu0 %v698
        %v737 = vpop.f32.mrb[0].mxu0
        %v738 = vadd.f32 %v688, %v737
        %v739 = vpop.f32.mrb[0].mxu0
        %v740 = vpop.f32.mrb[0].mxu0
        %v741 = vadd.f32 %v688, %v740
        %v742 = vpop.f32.mrb[0].mxu0
        %743 = vmatprep.mubr.bf16.mxu0 0
        %744 = vmatmul.mubr.bf16.gmra.mrb[0].mxu0 %v701
        %v745 = vpop.f32.mrb[0].mxu0
        %v746 = vadd.f32 %v688, %v745
        %v747 = vpop.f32.mrb[0].mxu0
        %v748 = vpop.f32.mrb[0].mxu0
        %v749 = vadd.f32 %v688, %v748
        %v750 = vpop.f32.mrb[0].mxu0
        %751 = vdwg.mxu0
        %v752 = vmax.f32 %v738, 0.0
        %v753 = vmax.f32 %v741, 0.0
        %v754 = vmax.f32 %v746, 0.0
        %v755 = vmax.f32 %v749, 0.0
        %v756 = vpack.c.bf16 %v753, %v752
        %v757 = vpack.c.bf16 %v755, %v754
        %v758 = vld [vmem:[%s8] sm:$0xf]
        %v759 = vld [vmem:[%s8 + $0x4] sm:$0xf]
        %v760 = vld [vmem:[%s8 + $0x8] sm:$0xf]
        %v761 = vld [vmem:[%s8 + $0xc] sm:$0xf]
        %v762 = vld [vmem:[%s9] sm:$0x1]
        %v764 = vlaneseq
        %v765 = vshrl.u32 %v764, 7
        %v766 = vsub.s32 0, %v765
        %v767 = vrot.slane %v762, %v766
        %v773 = vunpack.c.l.b16 %v758
        %v774 = vunpack.c.l.b16 %v759
        %v775 = vunpack.c.l.b16 %v760
        %v776 = vunpack.c.l.b16 %v761
        %v777 = vpack.c.b16 %v774, %v773
        %v778 = vpack.c.b16 %v776, %v775
        %v782 = vsel %vm563, %v756, 0
        %v785 = vsel %vm563, %v757, 0
        %787 = vmatprep.subr.bf16.mxu0 0
        %788 = vmatpush1.bf16.msra.mxu0 %v777
        %789 = vmatprep.subr.bf16.mxu0 0
        %790 = vmatpush1.bf16.msra.mxu0 %v778
        %791 = vmatprep.subr.bf16.mxu0 0
        %792 = vmatpush1.bf16.msra.mxu0 0
        %793 = vmatprep.subr.bf16.mxu0 0
        %794 = vmatpush1.bf16.msra.mxu0 0
        %795 = vmatprep.subr.bf16.mxu0 0
        %796 = vmatpush1.bf16.msra.mxu0 0
        %797 = vmatprep.subr.bf16.mxu0 0
        %798 = vmatpush1.bf16.msra.mxu0 0
        %799 = vmatprep.subr.bf16.mxu0 0
        %800 = vmatpush1.bf16.msra.mxu0 0
        %801 = vmatprep.subr.bf16.mxu0 0
        %802 = vmatpush1.bf16.msra.mxu0 0
        %803 = vmatprep.subr.bf16.mxu0 0
        %804 = vmatpush1.bf16.msra.mxu0 0
        %805 = vmatprep.subr.bf16.mxu0 0
        %806 = vmatpush1.bf16.msra.mxu0 0
        %807 = vmatprep.subr.bf16.mxu0 0
        %808 = vmatpush1.bf16.msra.mxu0 0
        %809 = vmatprep.subr.bf16.mxu0 0
        %810 = vmatpush1.bf16.msra.mxu0 0
        %811 = vmatprep.subr.bf16.mxu0 0
        %812 = vmatpush1.bf16.msra.mxu0 0
        %813 = vmatprep.subr.bf16.mxu0 0
        %814 = vmatpush1.bf16.msra.mxu0 0
        %815 = vmatprep.subr.bf16.mxu0 0
        %816 = vmatpush1.bf16.msra.mxu0 0
        %817 = vmatprep.subr.bf16.mxu0 0
        %818 = vmatpush1.bf16.msra.mxu0 0
        %819 = vmatprep.mubr.bf16.mxu0 0
        %820 = vmatmul.mubr.bf16.gmra.mrb[0].mxu0 %v782
        %v821 = vpop.f32.mrb[0].mxu0
        %v822 = vadd.f32 %v767, %v821
        %v823 = vpop.f32.mrb[0].mxu0
        %v824 = vpop.f32.mrb[0].mxu0
        %v825 = vadd.f32 %v767, %v824
        %v826 = vpop.f32.mrb[0].mxu0
        %827 = vmatprep.mubr.bf16.mxu0 0
        %828 = vmatmul.mubr.bf16.gmra.mrb[0].mxu0 %v785
        %v829 = vpop.f32.mrb[0].mxu0
        %v830 = vadd.f32 %v767, %v829
        %v831 = vpop.f32.mrb[0].mxu0
        %v832 = vpop.f32.mrb[0].mxu0
        %v833 = vadd.f32 %v767, %v832
        %v834 = vpop.f32.mrb[0].mxu0
        %835 = vdwg.mxu0
        %v836 = vsub.f32 0.0, %v822
        %v837 = vsub.f32 0.0, %v825
        %v838 = vsub.f32 0.0, %v830
        %v839 = vsub.f32 0.0, %v833
        %v840 = vmul.f32 %v836, 1.442695
        %v841 = vpow.pop %v840
        %v842 = vmul.f32 %v837, 1.442695
        %v843 = vpow.pop %v842
        %v844 = vmul.f32 %v838, 1.442695
        %v845 = vpow.pop %v844
        %v846 = vmul.f32 %v839, 1.442695
        %v847 = vpow.pop %v846
        %v848 = vadd.f32 %v841, 1.0
        %v849 = vadd.f32 %v843, 1.0
        %v850 = vadd.f32 %v845, 1.0
        %v851 = vadd.f32 %v847, 1.0
        %v852 = vrcp.pop %v848
        %v853 = vrcp.pop %v849
        %v854 = vrcp.pop %v850
        %v855 = vrcp.pop %v851
        %v856 = vpack.c.bf16 %v853, %v852
        %v857 = vpack.c.bf16 %v855, %v854
        %v860 = vunpack.c.l.b16 %v856
        %v861 = vunpack.c.h.b16 %v856
        %v862 = vunpack.c.l.b16 %v857
        %v863 = vunpack.c.h.b16 %v857
        %v864 = vpack.c.b16 %v860, %v860
        %v865 = vpack.c.b16 %v861, %v861
        %v866 = vpack.c.b16 %v862, %v862
        %v867 = vpack.c.b16 %v863, %v863
        %vm872 = vcmask 519168
        %873 = vst.msk [vmem:[%s397] sm:$0xf] %vm872, %v864
        %874 = vst.msk [vmem:[%s397 + $0x4] sm:$0xf] %vm872, %v865
        %875 = vst.msk [vmem:[%s397 + $0x8] sm:$0xf] %vm872, %v866
        %876 = vst.msk [vmem:[%s397 + $0xc] sm:$0xf] %vm872, %v867
        %v877 = vpack.c.bf16 %v608, %v605
        %v878 = vpack.c.bf16 %v616, %v613
        %v881 = vunpack.c.l.b16 %v877
        %v882 = vunpack.c.h.b16 %v877
        %v883 = vunpack.c.l.b16 %v878
        %v884 = vunpack.c.h.b16 %v878
        %v885 = vpack.c.b16 %v881, %v881
        %v886 = vpack.c.b16 %v882, %v882
        %v887 = vpack.c.b16 %v883, %v883
        %v888 = vpack.c.b16 %v884, %v884
        %vm893 = vcmask 257024
        %894 = vst.msk [vmem:[%s422] sm:$0xf] %vm893, %v885
        %895 = vst.msk [vmem:[%s422 + $0x4] sm:$0xf] %vm893, %v886
        %896 = vst.msk [vmem:[%s422 + $0x8] sm:$0xf] %vm893, %v887
        %897 = vst.msk [vmem:[%s422 + $0xc] sm:$0xf] %vm893, %v888
        %s898 = sand.u32 %s254, 1
        %s899 = scalar_lea.sflag [#allocation3], %s898
        %s900 = sand.u32 %s254, 1
        %s901 = smul.addr %s900, 16
        %s902 = scalar_lea.vmem [#allocation2], %s901
        %s903 = smul.u32 4, %s26
        %p904 = scmp.lt.s32.totalorder %s903, 7
        %s905 = scalar_select %p904, %s903, 7
        %s906 = smul.addr %s905, 4
        %s907 = scalar_lea.vmem %s11, %s906
        // Predicated region
        $region61: #{tpu_custom_call.1} parent=59 // pred_check
          %p908 = pneg %p264
        $region62: #{tpu_custom_call.1} parent=59 // pred_check_branch
          %910 = sbr.rel (%p908) target = $region64
        $region63: #{tpu_custom_call.1} parent=59 // pred_region
          %s911 = smul.u32 4, %s26
          %s913 = ssub.s32 256, 256
          %914 = vsyncadd %s899, %s913
          %s915 = smul.addr %s911, 64
          %s916 = scalar_lea.hbm %s10, %s915
          %s917 = sshll.u32 %s902, 4
          %s918 = int_to_ptr.vmem [resolvable:$true] %s917
          %923 = dma.vmem_to_hbm [thread:$0]  %s918, 256, %s916, %s899, 64, 64, 4
        $region64: #{tpu_custom_call.1} parent=59 // pred_fallthru
          _
        // Predicated region
        $region65: #{tpu_custom_call.1} parent=59 // pred_check
          %p924 = pneg %p290
        $region66: #{tpu_custom_call.1} parent=59 // pred_check_branch
          %926 = sbr.rel (%p924) target = $region68
        $region67: #{tpu_custom_call.1} parent=59 // pred_region
          %s927 = smul.u32 4, %s26
        $region68: #{tpu_custom_call.1} parent=59 // pred_fallthru
          _
      $region60: #{tpu_custom_call.1} parent=5 // pred_fallthru
        _
      %p928 = scmp.le.s32.totalorder 2, %s21
      // Predicated region
      $region69: #{tpu_custom_call.1} parent=5 // pred_check
        %p929 = pneg %p928
      $region70: #{tpu_custom_call.1} parent=5 // pred_check_branch
        %931 = sbr.rel (%p929) target = $region72
      $region71: #{tpu_custom_call.1} parent=5 // pred_region
        %s932 = ssub.s32 %s21, 2
        // Predicated region
        $region73: #{tpu_custom_call.1} parent=71 // pred_check
          %p933 = pneg %p270
        $region74: #{tpu_custom_call.1} parent=71 // pred_check_branch
          %935 = sbr.rel (%p933) target = $region76
        $region75: #{tpu_custom_call.1} parent=71 // pred_region
          %s936 = sand.u32 %s255, 1
          %s937 = scalar_lea.sflag [#allocation3], %s936
          %s938 = sand.u32 %s255, 1
          %s939 = smul.addr %s938, 16
          %s940 = scalar_lea.vmem [#allocation2], %s939
          %941 = dma.done %s937, 256
        $region76: #{tpu_custom_call.1} parent=71 // pred_fallthru
          _
        // Predicated region
        $region77: #{tpu_custom_call.1} parent=71 // pred_check
          %p942 = pneg %p296
        $region78: #{tpu_custom_call.1} parent=71 // pred_check_branch
          %944 = sbr.rel (%p942) target = $region80
        $region79: #{tpu_custom_call.1} parent=71 // pred_region
          %s945 = smul.u32 4, %s27
          %p946 = scmp.lt.s32.totalorder %s945, 7
          %s947 = scalar_select %p946, %s945, 7
          %s948 = smul.addr %s947, 4
          %s949 = scalar_lea.vmem %s11, %s948
        $region80: #{tpu_custom_call.1} parent=71 // pred_fallthru
          _
      $region72: #{tpu_custom_call.1} parent=5 // pred_fallthru
        _
    $region6: #{tpu_custom_call.1} parent=1 // loop_footer
      %s25 = sadd.s32 1, %s21
    $region7: #{tpu_custom_call.1} parent=1 // loop_footer_branch
      %20 = sbr.rel target = $region3
    $region8: #{tpu_custom_call.1} parent=1 // loop_exit
      _
    %950 = vsyncpa [#allocation3], 1
    %s951 = scalar_lea.sflag [#allocation3], 1
    %952 = vsyncpa %s951, 1

</llo_original>
